<compile_context>
chip_gen: v7x
topology: tpu7x:2x2x1
jax: 0.10.0
libtpu: 0.0.40
codegen_flags: <defaults>
</compile_context>

<pallas_src>
import math

import jax
import jax.numpy as jnp
from jax.experimental import pallas as pl
from jax.experimental.pallas import tpu as pltpu


# ----------------------------------------------------------------------------
# Fused kernel: out = h_flat @ W_block + bias   (f32 accumulation on the MXU)
# ----------------------------------------------------------------------------
def _fused_recon_kernel(h_ref, w_ref, b_ref, o_ref):
    acc = jnp.dot(h_ref[...], w_ref[...], preferred_element_type=jnp.float32)
    o_ref[...] = (acc + b_ref[...].astype(jnp.float32)).astype(o_ref.dtype)


_VMEM_LIMIT_BYTES = 32 * 1024 * 1024   # explicit: > v5e's 16 MiB default, fits v7x's 64 MiB/TC
_VMEM_TILE_BUDGET = 24 * 1024 * 1024   # budget used to derive the batch tile (headroom under limit)


def _select_batch_tile(B, K, N_pad, itemsize, *, max_tile=512):
    """Largest multiple-of-8 batch tile that fits the VMEM budget (capped at max_tile).

    Accounting (everything double-buffered by the BlockSpec pipeliner):
      fixed   = 2*(K*N_pad + N_pad)  * itemsize   (weights + bias, resident)
      per_row = 2*(K + N_pad)        * itemsize   (h tile in + out tile back)
    The 512-row cap keeps >=4 grid steps once B reaches a few thousand rows
    (measured sweet spot ~85% of HBM roofline) while amortizing the ~0.35 us
    per-step overhead.
    """
    fixed = 2 * (K * N_pad + N_pad) * itemsize
    per_row = 2 * (K + N_pad) * itemsize
    avail = _VMEM_TILE_BUDGET - fixed
    cap = max_tile if avail <= 0 else min(max_tile, avail // per_row)
    cap = max(8, (int(cap) // 8) * 8)
    if B <= cap:
        return B          # single full-extent block (always a legal block shape)
    return cap


def fused_recon(h_flat, w_block, bias):
    """h_flat: (B, K), w_block: (K, N_pad), bias: (1, N_pad) -> (B, N_pad)."""
    B, K = h_flat.shape
    N_pad = w_block.shape[1]
    itemsize = jnp.dtype(h_flat.dtype).itemsize
    tb = _select_batch_tile(B, K, N_pad, itemsize)
    grid = (pl.cdiv(B, tb),)

    return pl.pallas_call(
        _fused_recon_kernel,
        out_shape=jax.ShapeDtypeStruct((B, N_pad), h_flat.dtype),
        grid_spec=pl.GridSpec(
            grid=grid,
            in_specs=[
                pl.BlockSpec((tb, K), lambda i: (i, 0)),       # batch-tiled activations
                pl.BlockSpec((K, N_pad), lambda i: (0, 0)),    # resident weights
                pl.BlockSpec((1, N_pad), lambda i: (0, 0)),    # resident bias
            ],
            out_specs=pl.BlockSpec((tb, N_pad), lambda i: (i, 0)),
        ),
        compiler_params=pltpu.CompilerParams(
            dimension_semantics=("parallel",),        # megacore-shardable on v7x
            vmem_limit_bytes=_VMEM_LIMIT_BYTES,
        ),
    )(h_flat, w_block, bias)


# ----------------------------------------------------------------------------
# Parameter init (mirrors the PyTorch shapes / init formulas)
# ----------------------------------------------------------------------------
def _xavier_uniform(key, shape, gain):
    # PyTorch xavier_uniform_ on a 2D tensor: fan_out = shape[0], fan_in = shape[1]
    fan_out, fan_in = shape
    bound = gain * math.sqrt(6.0 / (fan_in + fan_out))
    return jax.random.uniform(key, shape, jnp.float32, -bound, bound)


def init_reconstructor_params(key, d_numerical, categories, d_token):
    gain = 1.0 / math.sqrt(2.0)
    keys = jax.random.split(key, 1 + 2 * len(categories))
    params = {}
    params["weight"] = _xavier_uniform(keys[0], (d_numerical, d_token), gain)
    params["cat_w"] = []   # (d_cat, d_token), like nn.Linear.weight
    params["cat_b"] = []
    for i, d in enumerate(categories):
        w = _xavier_uniform(keys[1 + 2 * i], (d, d_token), gain)
        bb = 1.0 / math.sqrt(d_token)   # nn.Linear default bias init
        b = jax.random.uniform(keys[2 + 2 * i], (d,), jnp.float32, -bb, bb)
        params["cat_w"].append(w)
        params["cat_b"].append(b)
    return params


def build_fused_params(params, d_numerical, categories, d_token,
                       compute_dtype=jnp.bfloat16):
    """One-time packing: block-diagonal weight + concatenated, lane-padded bias.

    Column layout of W_block (N_pad = round_up(d_numerical + sum(categories), 128)):
      [0, d_numerical)                       : numerical heads (one col each)
      [off_i, off_i + categories[i])         : categorical head i
      remaining columns                      : zero padding (trimmed by wrapper)

    compute_dtype defaults to bf16 (native MXU input on v5e/v6e/v7x); f32
    accumulation happens inside the kernel, so accuracy loss is only the
    operand rounding. Pass jnp.float32 for a bit-exact match to the reference.
    """
    n_tokens = d_numerical + len(categories)
    K = n_tokens * d_token
    d_out = d_numerical + sum(categories)
    n_pad = max(128, ((d_out + 127) // 128) * 128)   # lane-dense output slab

    w_block = jnp.zeros((K, n_pad), jnp.float32)
    bias = jnp.zeros((n_pad,), jnp.float32)

    # numerical heads: column n gets weight[n, :] against token n
    for n in range(d_numerical):
        w_block = w_block.at[n * d_token:(n + 1) * d_token, n].set(params["weight"][n])

    # categorical heads: block (token d_numerical+i) x (cols off:off+d) = cat_w[i].T
    off = d_numerical
    for i, d in enumerate(categories):
        tok = d_numerical + i
        w_block = w_block.at[tok * d_token:(tok + 1) * d_token, off:off + d].set(
            params["cat_w"][i].T)
        bias = bias.at[off:off + d].set(params["cat_b"][i])
        off += d

    fused = {
        "w_block": w_block.astype(compute_dtype),
        "bias": bias.reshape(1, n_pad).astype(jnp.float32),   # bias add stays f32 (VPU)
        "d_out": d_out,
        "n_pad": n_pad,
    }
    return fused


# ----------------------------------------------------------------------------
# Forward wrapper: one kernel launch, then cheap view-slices of the output slab
# ----------------------------------------------------------------------------
def reconstructor_forward(fused, h, d_numerical, categories):
    B, n_tokens, d_token = h.shape
    h_flat = h.reshape(B, n_tokens * d_token)            # contiguous reshape (free)
    # Prefer producing h already in the compute dtype upstream; this cast is a
    # no-op in that case (avoids an extra HBM pass over h under jit).
    if h_flat.dtype != fused["w_block"].dtype:
        h_flat = h_flat.astype(fused["w_block"].dtype)

    out = fused_recon(h_flat, fused["w_block"], fused["bias"])   # (B, N_pad)

    recon_x_num = out[:, :d_numerical]
    recon_x_cat = []
    off = d_numerical
    for d in categories:
        recon_x_cat.append(out[:, off:off + d])
        off += d
    return recon_x_num, recon_x_cat


# ----------------------------------------------------------------------------
# Pure-JAX reference (matches the PyTorch forward exactly)
# ----------------------------------------------------------------------------
def reconstructor_ref(params, h, d_numerical, categories):
    h_num = h[:, :d_numerical]
    h_cat = h[:, d_numerical:]
    recon_x_num = jnp.sum(h_num * params["weight"][None], axis=-1)
    recon_x_cat = []
    for i, _d in enumerate(categories):
        recon_x_cat.append(h_cat[:, i] @ params["cat_w"][i].T + params["cat_b"][i])
    return recon_x_num, recon_x_cat


if __name__ == "__main__":
    d_numerical = 4
    categories = [3, 5, 2]
    d_token = 32
    B = 8

    key = jax.random.PRNGKey(0)
    k_param, k_h = jax.random.split(key)
    params = init_reconstructor_params(k_param, d_numerical, categories, d_token)

    n_tokens = d_numerical + len(categories)
    h = jax.random.normal(k_h, (B, n_tokens, d_token), jnp.float32)
    ref_num, ref_cat = reconstructor_ref(params, h, d_numerical, categories)

    # --- f32 path: bit-tight check of the fused block-diagonal kernel --------
    fused_f32 = build_fused_params(params, d_numerical, categories, d_token,
                                   compute_dtype=jnp.float32)
    num32, cat32 = reconstructor_forward(fused_f32, h, d_numerical, categories)
    num32 = jax.block_until_ready(num32)
    cat32 = [jax.block_until_ready(x) for x in cat32]
    assert num32.shape == (B, d_numerical)
    assert jnp.allclose(num32, ref_num, atol=1e-5, rtol=1e-5)
    for got, want, d in zip(cat32, ref_cat, categories):
        assert got.shape == (B, d)
        assert jnp.allclose(got, want, atol=1e-5, rtol=1e-5)

    # --- bf16 path (default / production): relaxed tolerance -----------------
    fused_bf16 = build_fused_params(params, d_numerical, categories, d_token)  # bf16 default
    h_bf16 = h.astype(jnp.bfloat16)      # simulate upstream producing bf16 activations
    num16, cat16 = reconstructor_forward(fused_bf16, h_bf16, d_numerical, categories)
    num16 = jax.block_until_ready(num16)
    cat16 = [jax.block_until_ready(x) for x in cat16]
    assert num16.shape == (B, d_numerical)
    assert jnp.allclose(num16.astype(jnp.float32), ref_num, atol=5e-2, rtol=5e-2)
    for got, want, d in zip(cat16, ref_cat, categories):
        assert got.shape == (B, d)
        assert jnp.allclose(got.astype(jnp.float32), want, atol=5e-2, rtol=5e-2)

    print("KERNEL_OK")
</pallas_src>

<mosaic_0001>
module attributes {stable_mosaic.version = 11 : i64} {
  func.func @_fused_recon_kernel(%arg0: i32, %arg1: memref<8x224xf32, #tpu.memory_space<vmem>>, %arg2: memref<224x128xf32, #tpu.memory_space<vmem>>, %arg3: memref<1x128xf32, #tpu.memory_space<vmem>>, %arg4: memref<8x128xf32, #tpu.memory_space<vmem>>) attributes {dimension_semantics = [#tpu.dimension_semantics<parallel>], iteration_bounds = array<i64: 1>, scalar_prefetch = 0 : i64, scratch_operands = 0 : i64, tpu.core_type = #tpu.core_type<tc>, window_params = [{transform_indices = @transform_0, window_bounds = array<i64: 8, 224>}, {pipeline_mode = #tpu.pipeline_mode<synchronous>, transform_indices = @transform_1, window_bounds = array<i64: 224, 128>}, {pipeline_mode = #tpu.pipeline_mode<synchronous>, transform_indices = @transform_2, window_bounds = array<i64: 1, 128>}, {transform_indices = @transform_3, window_bounds = array<i64: 8, 128>}]} {
    %c0 = arith.constant 0 : index
    %c0_0 = arith.constant 0 : index
    %0 = vector.load %arg1[%c0, %c0_0] : memref<8x224xf32, #tpu.memory_space<vmem>>, vector<8x224xf32>
    %c0_1 = arith.constant 0 : index
    %c0_2 = arith.constant 0 : index
    %1 = vector.load %arg2[%c0_1, %c0_2] : memref<224x128xf32, #tpu.memory_space<vmem>>, vector<224x128xf32>
    %cst = arith.constant dense<0.000000e+00> : vector<8x128xf32>
    %2 = tpu.matmul %0, %1, %cst {dimension_numbers = #tpu.dot_dimension_numbers<[1], [0], [0], [1], [0, 0, 1, 1], [], []>} : vector<8x224xf32>, vector<224x128xf32>, vector<8x128xf32> -> vector<8x128xf32>
    %c0_3 = arith.constant 0 : index
    %c0_4 = arith.constant 0 : index
    %3 = vector.load %arg3[%c0_3, %c0_4] : memref<1x128xf32, #tpu.memory_space<vmem>>, vector<1x128xf32>
    %4 = vector.broadcast %3 : vector<1x128xf32> to vector<8x128xf32>
    %5 = arith.addf %2, %4 : vector<8x128xf32>
    %c0_5 = arith.constant 0 : index
    %c0_6 = arith.constant 0 : index
    %6 = vector.load %arg4[%c0_5, %c0_6] : memref<8x128xf32, #tpu.memory_space<vmem>>, vector<8x128xf32>
    tpu.vector_store %arg4[%c0_5, %c0_6], %5 {strides = array<i32>} : memref<8x128xf32, #tpu.memory_space<vmem>>, vector<8x128xf32>,
    return
  }
  func.func @transform_0(%arg0: i32) -> (i32, i32) {
    %c0_i32 = arith.constant 0 : i32
    %c0_i32_0 = arith.constant 0 : i32
    return %arg0, %c0_i32 : i32, i32
  }
  func.func @transform_1(%arg0: i32) -> (i32, i32) {
    %c0_i32 = arith.constant 0 : i32
    %c0_i32_0 = arith.constant 0 : i32
    %c0_i32_1 = arith.constant 0 : i32
    return %c0_i32, %c0_i32_0 : i32, i32
  }
  func.func @transform_2(%arg0: i32) -> (i32, i32) {
    %c0_i32 = arith.constant 0 : i32
    %c0_i32_0 = arith.constant 0 : i32
    %c0_i32_1 = arith.constant 0 : i32
    return %c0_i32, %c0_i32_0 : i32, i32
  }
  func.func @transform_3(%arg0: i32) -> (i32, i32) {
    %c0_i32 = arith.constant 0 : i32
    %c0_i32_0 = arith.constant 0 : i32
    return %arg0, %c0_i32 : i32, i32
  }
}

</mosaic_0001>

<llo_original>
// kernel: tpu_custom_call.1
$region0: #{tpu_custom_call.1}
  #allocation0 [shape = 'u32[]', space=smem, size = 0x4, offset = 0x4, fixed_abs, tag = 'smem constant byte address 0x4 - core index']
  #allocation1 [shape = 'u32[144,128]{1,0:T(1,128)}', space=vmem, size = 0x12000, scoped, tag = 'internal scratch']
  %s0 = inlined_call_operand.hbm [shape: f32[8,224], index: 0, kind: input, shape index: {}]
  %s1 = inlined_call_operand.hbm [shape: f32[224,128], index: 1, kind: input, shape index: {}]
  %s2 = inlined_call_operand.vmem [shape: f32[1,128], index: 2, kind: input, shape index: {}]
  %s3 = inlined_call_operand.hbm [shape: f32[8,128], index: 3, kind: output, shape index: {}]
  %s4 = sld [smem:[#allocation0]]
  $region30: #{tpu_custom_call.1} parent=0
    _
  %s6 = ssub.s32 1, %s4
  %s7 = scalar_select 0, %s6, %s4
  $region1: #{tpu_custom_call.1} parent=0
    #allocation2 [shape = 'u8[8192]{0}', space=vmem, size = 0x2000, scoped, tag = 'input window, operand 0, single buffered']
    #allocation3 [shape = 's32[1]{0}', space=sflag, size = 0x4, scoped, tag = 'scoped memory for tpu_custom_call.1']
    #allocation4 [shape = 's32[1]{0}', space=sflag, size = 0x4, scoped, tag = 'scoped memory for tpu_custom_call.1']
    #allocation5 [shape = 'u8[114688]{0}', space=vmem, size = 0x1c000, scoped, tag = 'input window, operand 1, single buffered']
    #allocation6 [shape = 's32[1]{0}', space=sflag, size = 0x4, scoped, tag = 'scoped memory for tpu_custom_call.1']
    #allocation7 [shape = 'u8[4096]{0}', space=vmem, size = 0x1000, scoped, tag = 'output window, operand 0, single buffered']
    %8 = vsyncpa [#allocation3], 0
    %9 = vsyncpa [#allocation6], 0
    %10 = vsyncpa [#allocation4], 0
    // Predicated region
    $region2: #{tpu_custom_call.1} parent=1 // pred_check
      _
    $region3: #{tpu_custom_call.1} parent=1 // pred_check_branch
      %12 = sbr.rel (0) target = $region5
    $region4: #{tpu_custom_call.1} parent=1 // pred_region
      %s14 = ssub.s32 256, 256
      %15 = vsyncadd [#allocation3], %s14
      %s17 = sshll.u32 [#allocation2], 4
      %s18 = int_to_ptr.vmem [resolvable:$true] %s17
      %20 = dma.hbm_to_vmem [thread:$0]  %s0, 256, %s18, [#allocation3]
    $region5: #{tpu_custom_call.1} parent=1 // pred_fallthru
      _
    // Predicated region
    $region6: #{tpu_custom_call.1} parent=1 // pred_check
      _
    $region7: #{tpu_custom_call.1} parent=1 // pred_check_branch
      %22 = sbr.rel (0) target = $region9
    $region8: #{tpu_custom_call.1} parent=1 // pred_region
      %s24 = ssub.s32 3584, 3584
      %25 = vsyncadd [#allocation6], %s24
      %s26 = sshll.u32 [#allocation5], 4
      %s27 = int_to_ptr.vmem [resolvable:$true] %s26
      %32 = dma.hbm_to_vmem [thread:$0]  %s1, 3584, %s27, [#allocation6], 128, 128, 8
    $region9: #{tpu_custom_call.1} parent=1 // pred_fallthru
      _
    // Predicated region
    $region10: #{tpu_custom_call.1} parent=1 // pred_check
      _
    $region11: #{tpu_custom_call.1} parent=1 // pred_check_branch
      %34 = sbr.rel (0) target = $region13
    $region12: #{tpu_custom_call.1} parent=1 // pred_region
      _
    $region13: #{tpu_custom_call.1} parent=1 // pred_fallthru
      _
    // Predicated region
    $region14: #{tpu_custom_call.1} parent=1 // pred_check
      _
    $region15: #{tpu_custom_call.1} parent=1 // pred_check_branch
      %36 = sbr.rel (0) target = $region17
    $region16: #{tpu_custom_call.1} parent=1 // pred_region
      %37 = dma.done [#allocation3], 256
    $region17: #{tpu_custom_call.1} parent=1 // pred_fallthru
      _
    // Predicated region
    $region18: #{tpu_custom_call.1} parent=1 // pred_check
      _
    $region19: #{tpu_custom_call.1} parent=1 // pred_check_branch
      %39 = sbr.rel (0) target = $region21
    $region20: #{tpu_custom_call.1} parent=1 // pred_region
      %40 = dma.done [#allocation6], 3584
    $region21: #{tpu_custom_call.1} parent=1 // pred_fallthru
      _
    %v41 = vld [vmem:[#allocation2] sm:$0xff]
    %v42 = vld [vmem:[#allocation2 + $0x8] sm:$0xff]
    %v43 = vld [vmem:[#allocation5] sm:$0xff]
    %v44 = vld [vmem:[#allocation5 + $0x8] sm:$0xff]
    %v45 = vld [vmem:[#allocation5 + $0x10] sm:$0xff]
    %v46 = vld [vmem:[#allocation5 + $0x18] sm:$0xff]
    %v47 = vld [vmem:[#allocation5 + $0x20] sm:$0xff]
    %v48 = vld [vmem:[#allocation5 + $0x28] sm:$0xff]
    %v49 = vld [vmem:[#allocation5 + $0x30] sm:$0xff]
    %v50 = vld [vmem:[#allocation5 + $0x38] sm:$0xff]
    %v51 = vld [vmem:[#allocation5 + $0x40] sm:$0xff]
    %v52 = vld [vmem:[#allocation5 + $0x48] sm:$0xff]
    %v53 = vld [vmem:[#allocation5 + $0x50] sm:$0xff]
    %v54 = vld [vmem:[#allocation5 + $0x58] sm:$0xff]
    %v55 = vld [vmem:[#allocation5 + $0x60] sm:$0xff]
    %v56 = vld [vmem:[#allocation5 + $0x68] sm:$0xff]
    %v57 = vld [vmem:[#allocation5 + $0x70] sm:$0xff]
    %v58 = vld [vmem:[#allocation5 + $0x78] sm:$0xff]
    %v59 = vld [vmem:[#allocation5 + $0x80] sm:$0xff]
    %v60 = vld [vmem:[#allocation5 + $0x88] sm:$0xff]
    %v61 = vld [vmem:[#allocation5 + $0x90] sm:$0xff]
    %v62 = vld [vmem:[#allocation5 + $0x98] sm:$0xff]
    %v63 = vld [vmem:[#allocation5 + $0xa0] sm:$0xff]
    %v64 = vld [vmem:[#allocation5 + $0xa8] sm:$0xff]
    %v65 = vld [vmem:[#allocation5 + $0xb0] sm:$0xff]
    %v66 = vld [vmem:[#allocation5 + $0xb8] sm:$0xff]
    %v67 = vld [vmem:[#allocation5 + $0xc0] sm:$0xff]
    %v68 = vld [vmem:[#allocation5 + $0xc8] sm:$0xff]
    %v69 = vld [vmem:[#allocation5 + $0xd0] sm:$0xff]
    %v70 = vld [vmem:[#allocation5 + $0xd8] sm:$0xff]
    %v71 = vld [vmem:[%s2] sm:$0x1]
    %v73 = vlaneseq
    %v74 = vshrl.u32 %v73, 7
    %v75 = vsub.s32 0, %v74
    %v76 = vrot.slane %v71, %v75
    %vm78 = vcmask 785408
    %v80 = vsel %vm78, %v42, 0
    %82 = vmatprep.subr.mxu0 0.0
    %83 = vmatpush1.msra.mxu0 %v43
    %84 = vmatprep.subr.mxu0 0.0
    %85 = vmatpush1.msra.mxu0 %v44
    %86 = vmatprep.subr.mxu0 0.0
    %87 = vmatpush1.msra.mxu0 %v45
    %88 = vmatprep.subr.mxu0 0.0
    %89 = vmatpush1.msra.mxu0 %v46
    %90 = vmatprep.subr.mxu0 0.0
    %91 = vmatpush1.msra.mxu0 %v47
    %92 = vmatprep.subr.mxu0 0.0
    %93 = vmatpush1.msra.mxu0 %v48
    %94 = vmatprep.subr.mxu0 0.0
    %95 = vmatpush1.msra.mxu0 %v49
    %96 = vmatprep.subr.mxu0 0.0
    %97 = vmatpush1.msra.mxu0 %v50
    %98 = vmatprep.subr.mxu0 0.0
    %99 = vmatpush1.msra.mxu0 %v51
    %100 = vmatprep.subr.mxu0 0.0
    %101 = vmatpush1.msra.mxu0 %v52
    %102 = vmatprep.subr.mxu0 0.0
    %103 = vmatpush1.msra.mxu0 %v53
    %104 = vmatprep.subr.mxu0 0.0
    %105 = vmatpush1.msra.mxu0 %v54
    %106 = vmatprep.subr.mxu0 0.0
    %107 = vmatpush1.msra.mxu0 %v55
    %108 = vmatprep.subr.mxu0 0.0
    %109 = vmatpush1.msra.mxu0 %v56
    %110 = vmatprep.subr.mxu0 0.0
    %111 = vmatpush1.msra.mxu0 %v57
    %112 = vmatprep.subr.mxu0 0.0
    %113 = vmatpush1.msra.mxu0 %v58
    %114 = vmatprep.subr.mxu0 0.0
    %115 = vmatpush1.msra.mxu0 %v59
    %116 = vmatprep.subr.mxu0 0.0
    %117 = vmatpush1.msra.mxu0 %v60
    %118 = vmatprep.subr.mxu0 0.0
    %119 = vmatpush1.msra.mxu0 %v61
    %120 = vmatprep.subr.mxu0 0.0
    %121 = vmatpush1.msra.mxu0 %v62
    %122 = vmatprep.subr.mxu0 0.0
    %123 = vmatpush1.msra.mxu0 %v63
    %124 = vmatprep.subr.mxu0 0.0
    %125 = vmatpush1.msra.mxu0 %v64
    %126 = vmatprep.subr.mxu0 0.0
    %127 = vmatpush1.msra.mxu0 %v65
    %128 = vmatprep.subr.mxu0 0.0
    %129 = vmatpush1.msra.mxu0 %v66
    %130 = vmatprep.subr.mxu0 0.0
    %131 = vmatpush1.msra.mxu0 %v67
    %132 = vmatprep.subr.mxu0 0.0
    %133 = vmatpush1.msra.mxu0 %v68
    %134 = vmatprep.subr.mxu0 0.0
    %135 = vmatpush1.msra.mxu0 %v69
    %136 = vmatprep.subr.mxu0 0.0
    %137 = vmatpush1.msra.mxu0 %v70
    %138 = vmatprep.subr.mxu0 0.0
    %139 = vmatpush1.msra.mxu0 0.0
    %140 = vmatprep.subr.mxu0 0.0
    %141 = vmatpush1.msra.mxu0 0.0
    %142 = vmatprep.subr.mxu0 0.0
    %143 = vmatpush1.msra.mxu0 0.0
    %144 = vmatprep.subr.mxu0 0.0
    %145 = vmatpush1.msra.mxu0 0.0
    %146 = vmatprep.mubr.f32.mxu0 %v80
    %147 = vmatmul.mubr.f32.gmra.mrb[0].mxu0 %v41
    %v148 = vpop.f32.mrb[0].mxu0
    %v149 = vadd.f32 %v76, %v148
    %v150 = vpop.f32.mrb[0].mxu0
    %151 = vdwg.mxu0
    %152 = vst [vmem:[#allocation7] sm:$0xff] %v149
    // Predicated region
    $region22: #{tpu_custom_call.1} parent=1 // pred_check
      _
    $region23: #{tpu_custom_call.1} parent=1 // pred_check_branch
      %154 = sbr.rel (0) target = $region25
    $region24: #{tpu_custom_call.1} parent=1 // pred_region
      %s156 = ssub.s32 128, 128
      %157 = vsyncadd [#allocation4], %s156
      %s159 = sshll.u32 [#allocation7], 4
      %s160 = int_to_ptr.vmem [resolvable:$true] %s159
      %162 = dma.vmem_to_hbm [thread:$0]  %s160, 128, %s3, [#allocation4]
    $region25: #{tpu_custom_call.1} parent=1 // pred_fallthru
      _
    // Predicated region
    $region26: #{tpu_custom_call.1} parent=1 // pred_check
      _
    $region27: #{tpu_custom_call.1} parent=1 // pred_check_branch
      %164 = sbr.rel (0) target = $region29
    $region28: #{tpu_custom_call.1} parent=1 // pred_region
      %165 = dma.done [#allocation4], 128
    $region29: #{tpu_custom_call.1} parent=1 // pred_fallthru
      _
    %166 = vsyncpa [#allocation3], 1
    %167 = vsyncpa [#allocation6], 1
    %168 = vsyncpa [#allocation4], 1

</llo_original>
